<compile_context>
chip_gen: v7x
topology: tpu7x:2x2x1
jax: 0.10.0
libtpu: 0.0.40
codegen_flags: <defaults>
</compile_context>

<pallas_src>
import functools

import numpy as np
import jax
import jax.numpy as jnp
from jax.experimental import pallas as pl
from jax.experimental.pallas import tpu as pltpu

# ----------------------------- config (hp) -----------------------------------
INPUT_DIM = 32          # input_dim
NZ_MID = 32             # hp.nz_mid
N_PROC_LAYERS = 2       # hp.n_processing_layers
OUTPUT_DIMS = (8, 1)    # output_dims
LEAKY_SLOPE = 0.2
# activations: [tanh, sigmoid]  (one per output_dim, like the torch module)
ACTIVATIONS = (jnp.tanh, jax.nn.sigmoid)
OUT_TOTAL = sum(OUTPUT_DIMS)


def _round_up(v, m):
    return (v + m - 1) // m * m


def _leaky_relu(x):
    return jnp.where(x > 0, x, LEAKY_SLOPE * x)


# ------------------------------ Pallas kernel ---------------------------------
def _mlp_kernel(x_ref, w_in_ref, b_in_ref, w_h_ref, b_h_ref, w_out_ref,
                b_out_ref, o_ref, *, num_hidden, output_dims, activations):
    # x block is batch-major (TB, INPUT_DIM).  Contract the trailing dim of
    # both operands so the hidden state comes out feature-major (NZ_MID, TB):
    # batch on the 128-lane axis -> lane-dense VPU/EUP work and output store.
    h = jax.lax.dot_general(
        w_in_ref[...], x_ref[...],
        dimension_numbers=(((1,), (1,)), ((), ())),
        preferred_element_type=jnp.float32)
    h = _leaky_relu(h + b_in_ref[...])

    # Hidden blocks (static unrolled; weights stacked on leading axis).
    for i in range(num_hidden):
        h = jnp.dot(w_h_ref[i], h, preferred_element_type=jnp.float32)
        h = _leaky_relu(h + b_h_ref[i])

    # Head: Linear, no final activation -> (OUT_TOTAL, TB)
    out = jnp.dot(w_out_ref[...], h,
                  preferred_element_type=jnp.float32) + b_out_ref[...]

    # Per-chunk activations with static sublane-aligned slices (boundary at
    # row 8 == an (8,128) vreg boundary).  Each activation is evaluated exactly
    # once per element; no iota masks / selects / duplicated transcendentals.
    idx = 0
    for dim, act in zip(output_dims, activations):
        seg = out[idx:idx + dim, :]
        if act is not None:
            seg = act(seg)
        o_ref[idx:idx + dim, :] = seg.astype(o_ref.dtype)
        idx += dim


# --------------------------- pure-JAX forward ----------------------------------
def _xla_forward(x, params):
    """Plain XLA forward — small-batch fast path and numerical reference."""
    w_in, b_in, w_h, b_h, w_out, b_out = params
    h = _leaky_relu(x @ w_in + b_in)
    for i in range(N_PROC_LAYERS):
        h = _leaky_relu(h @ w_h[i] + b_h[i])
    out = h @ w_out + b_out
    outputs = []
    idx = 0
    for dim, act in zip(OUTPUT_DIMS, ACTIVATIONS):
        seg = out[:, idx:idx + dim]
        if act is not None:
            seg = act(seg)
        if dim == 1:
            seg = seg.reshape(-1)
        outputs.append(seg)
        idx += dim
    return outputs[0] if len(outputs) == 1 else outputs


# ------------------------------- wrapper ----------------------------------------
@functools.partial(jax.jit, static_argnames=("block_batch",))
def generalized_predictor_forward(x, params, block_batch=8192):
    """x: (B, INPUT_DIM) f32. Returns list of outputs per OUTPUT_DIMS chunk."""
    b = x.shape[0]

    # Small-batch fast path: padding to a full 128-lane tile (plus Pallas fixed
    # costs) is not worth it below one tile of batch.
    if b < 128:
        return _xla_forward(x, params)

    w_in, b_in, w_h, b_h, w_out, b_out = params

    # Batch tile: multiple of 128 lanes, large (amortize ~0.35 us/step), and
    # split so grid >= 2 whenever possible (megacore sharding on v7x).
    b_pad128 = _round_up(b, 128)
    tb = min(block_batch, b_pad128)
    if b_pad128 >= 256:
        tb = min(tb, _round_up((b_pad128 + 1) // 2, 128))
    b_pad = _round_up(b, tb)
    grid = (b_pad // tb,)

    # Keep x batch-major f32: no wrapper-side transpose / cast HBM round trip.
    x_p = x if b_pad == b else jnp.pad(x, ((0, b_pad - b), (0, 0)))

    # Feature-major f32 parameters; ~14 KB total, VMEM-resident (constant maps).
    w_in_t = w_in.T                                      # (NZ_MID, INPUT_DIM)
    b_in_t = b_in.reshape(NZ_MID, 1)                     # (NZ_MID, 1)
    w_h_t = jnp.swapaxes(w_h, -1, -2)                    # (L, NZ_MID, NZ_MID)
    b_h_t = b_h.reshape(N_PROC_LAYERS, NZ_MID, 1)        # (L, NZ_MID, 1)
    w_out_t = w_out.T                                    # (OUT_TOTAL, NZ_MID)
    b_out_t = b_out.reshape(OUT_TOTAL, 1)                # (OUT_TOTAL, 1)

    kernel = functools.partial(
        _mlp_kernel,
        num_hidden=N_PROC_LAYERS,
        output_dims=OUTPUT_DIMS,
        activations=ACTIVATIONS,
    )

    param_elems = (w_in_t.size + b_in_t.size + w_h_t.size + b_h_t.size
                   + w_out_t.size + b_out_t.size)
    cost = pl.CostEstimate(
        flops=2 * b_pad * (INPUT_DIM * NZ_MID
                           + N_PROC_LAYERS * NZ_MID * NZ_MID
                           + NZ_MID * OUT_TOTAL),
        transcendentals=b_pad * OUT_TOTAL,
        bytes_accessed=4 * (b_pad * INPUT_DIM + b_pad * OUT_TOTAL + param_elems),
    )

    # VMEM limit from the actual double-buffered tile footprint (+ headroom).
    tile_bytes = 4 * (tb * INPUT_DIM + OUT_TOTAL * tb)
    vmem_limit = int(max(2 * (tile_bytes + 4 * param_elems) + (1 << 20), 4 << 20))

    net_out_t = pl.pallas_call(
        kernel,
        out_shape=jax.ShapeDtypeStruct((OUT_TOTAL, b_pad), jnp.float32),
        grid=grid,
        in_specs=[
            pl.BlockSpec((tb, INPUT_DIM), lambda i: (i, 0)),                    # x tile
            pl.BlockSpec((NZ_MID, INPUT_DIM), lambda i: (0, 0)),                # W_in^T
            pl.BlockSpec((NZ_MID, 1), lambda i: (0, 0)),                        # b_in
            pl.BlockSpec((N_PROC_LAYERS, NZ_MID, NZ_MID), lambda i: (0, 0, 0)),  # W_h^T
            pl.BlockSpec((N_PROC_LAYERS, NZ_MID, 1), lambda i: (0, 0, 0)),       # b_h
            pl.BlockSpec((OUT_TOTAL, NZ_MID), lambda i: (0, 0)),                # W_out^T
            pl.BlockSpec((OUT_TOTAL, 1), lambda i: (0, 0)),                     # b_out
        ],
        out_specs=pl.BlockSpec((OUT_TOTAL, tb), lambda i: (0, i)),
        compiler_params=pltpu.CompilerParams(
            dimension_semantics=("parallel",),
            vmem_limit_bytes=vmem_limit,
        ),
        cost_estimate=cost,
    )(x_p, w_in_t, b_in_t, w_h_t, b_h_t, w_out_t, b_out_t)

    # Glue: drop batch padding, slice rows into chunks, transpose back to
    # batch-major, and .view(-1) for dims == 1 (activations already applied
    # inside the kernel).
    net_out_t = net_out_t[:, :b]
    outputs = []
    idx = 0
    for dim in OUTPUT_DIMS:
        seg = net_out_t[idx:idx + dim, :]
        seg = seg.reshape(-1) if dim == 1 else seg.T
        outputs.append(seg)
        idx += dim
    return outputs[0] if len(outputs) == 1 else outputs


# ----------------------------- param init -------------------------------------
def init_params(key):
    """PyTorch-Linear-style uniform(-1/sqrt(fan_in), 1/sqrt(fan_in)) init."""
    def linear(key, fan_in, fan_out):
        k_w, k_b = jax.random.split(key)
        bound = 1.0 / jnp.sqrt(fan_in)
        w = jax.random.uniform(k_w, (fan_in, fan_out), jnp.float32, -bound, bound)
        b = jax.random.uniform(k_b, (1, fan_out), jnp.float32, -bound, bound)
        return w, b

    keys = jax.random.split(key, 2 + N_PROC_LAYERS)
    w_in, b_in = linear(keys[0], INPUT_DIM, NZ_MID)

    w_hs, b_hs = [], []
    for i in range(N_PROC_LAYERS):
        w, bb = linear(keys[1 + i], NZ_MID, NZ_MID)
        w_hs.append(w)
        b_hs.append(bb)
    w_h = jnp.stack(w_hs, axis=0)                       # (L, NZ_MID, NZ_MID)
    b_h = jnp.stack(b_hs, axis=0)                       # (L, 1, NZ_MID)

    w_out, b_out = linear(keys[-1], NZ_MID, OUT_TOTAL)
    return w_in, b_in, w_h, b_h, w_out, b_out


# --------------------------------- main ----------------------------------------
if __name__ == "__main__":
    key = jax.random.PRNGKey(0)
    k_x, k_p = jax.random.split(key)
    params = init_params(k_p)

    batch = 256   # exercises the Pallas path with grid=(2,)
    x = jax.random.normal(k_x, (batch, INPUT_DIM), jnp.float32)

    outs = generalized_predictor_forward(x, params)
    outs = jax.block_until_ready(outs)

    # shapes follow the torch module (chunk 0: (B, 8); chunk 1: (B,) via view(-1))
    assert outs[0].shape == (batch, OUTPUT_DIMS[0])
    assert outs[1].shape == (batch,)
    assert bool(jnp.all(jnp.isfinite(outs[0]))) and bool(jnp.all(jnp.isfinite(outs[1])))
    # sigmoid chunk in [0,1], tanh chunk in [-1,1]
    assert bool(jnp.all((outs[1] >= 0.0) & (outs[1] <= 1.0)))
    assert bool(jnp.all(jnp.abs(outs[0]) <= 1.0))

    # numerical check vs. pure-JAX f32 reference (f32 matmuls throughout)
    refs = _xla_forward(x, params)
    np.testing.assert_allclose(np.asarray(outs[0]), np.asarray(refs[0]),
                               atol=2e-2, rtol=2e-2)
    np.testing.assert_allclose(np.asarray(outs[1]), np.asarray(refs[1]),
                               atol=2e-2, rtol=2e-2)

    # small-batch fast path (pure XLA) — shape sanity
    xs = jax.random.normal(k_x, (8, INPUT_DIM), jnp.float32)
    outs_small = jax.block_until_ready(generalized_predictor_forward(xs, params))
    assert outs_small[0].shape == (8, OUTPUT_DIMS[0]) and outs_small[1].shape == (8,)

    print("KERNEL_OK")
</pallas_src>

<mosaic_0001>
module attributes {stable_mosaic.version = 11 : i64} {
  func.func @_mlp_kernel(%arg0: i32, %arg1: memref<128x32xf32, #tpu.memory_space<vmem>>, %arg2: memref<32x32xf32, #tpu.memory_space<vmem>>, %arg3: memref<32x1xf32, #tpu.memory_space<vmem>>, %arg4: memref<2x32x32xf32, #tpu.memory_space<vmem>>, %arg5: memref<2x32x1xf32, #tpu.memory_space<vmem>>, %arg6: memref<9x32xf32, #tpu.memory_space<vmem>>, %arg7: memref<9x1xf32, #tpu.memory_space<vmem>>, %arg8: memref<9x128xf32, #tpu.memory_space<vmem>>) attributes {dimension_semantics = [#tpu.dimension_semantics<parallel>], iteration_bounds = array<i64: 2>, scalar_prefetch = 0 : i64, scratch_operands = 0 : i64, tpu.core_type = #tpu.core_type<tc>, window_params = [{transform_indices = @transform_0, window_bounds = array<i64: 128, 32>}, {pipeline_mode = #tpu.pipeline_mode<synchronous>, transform_indices = @transform_1, window_bounds = array<i64: 32, 32>}, {pipeline_mode = #tpu.pipeline_mode<synchronous>, transform_indices = @transform_2, window_bounds = array<i64: 32, 1>}, {pipeline_mode = #tpu.pipeline_mode<synchronous>, transform_indices = @transform_3, window_bounds = array<i64: 2, 32, 32>}, {pipeline_mode = #tpu.pipeline_mode<synchronous>, transform_indices = @transform_4, window_bounds = array<i64: 2, 32, 1>}, {pipeline_mode = #tpu.pipeline_mode<synchronous>, transform_indices = @transform_5, window_bounds = array<i64: 9, 32>}, {pipeline_mode = #tpu.pipeline_mode<synchronous>, transform_indices = @transform_6, window_bounds = array<i64: 9, 1>}, {transform_indices = @transform_7, window_bounds = array<i64: 9, 128>}]} {
    %c0 = arith.constant 0 : index
    %c0_0 = arith.constant 0 : index
    %0 = vector.load %arg2[%c0, %c0_0] : memref<32x32xf32, #tpu.memory_space<vmem>>, vector<32x32xf32>
    %c0_1 = arith.constant 0 : index
    %c0_2 = arith.constant 0 : index
    %1 = vector.load %arg1[%c0_1, %c0_2] : memref<128x32xf32, #tpu.memory_space<vmem>>, vector<128x32xf32>
    %cst = arith.constant dense<0.000000e+00> : vector<32x128xf32>
    %2 = tpu.matmul %0, %1, %cst {dimension_numbers = #tpu.dot_dimension_numbers<[1], [1], [0], [0], [0, 0, 1, 0], [], []>} : vector<32x32xf32>, vector<128x32xf32>, vector<32x128xf32> -> vector<32x128xf32>
    %c0_3 = arith.constant 0 : index
    %c0_4 = arith.constant 0 : index
    %3 = vector.load %arg3[%c0_3, %c0_4] : memref<32x1xf32, #tpu.memory_space<vmem>>, vector<32x1xf32>
    %4 = vector.broadcast %3 : vector<32x1xf32> to vector<32x128xf32>
    %5 = arith.addf %2, %4 : vector<32x128xf32>
    %cst_5 = arith.constant 0.000000e+00 : f32
    %6 = vector.broadcast %cst_5 : f32 to vector<32x128xf32>
    %7 = arith.cmpf ogt, %5, %6 : vector<32x128xf32>
    %cst_6 = arith.constant 2.000000e-01 : f32
    %8 = vector.broadcast %cst_6 : f32 to vector<32x128xf32>
    %9 = arith.mulf %8, %5 : vector<32x128xf32>
    %10 = arith.select %7, %5, %9 : vector<32x128xi1>, vector<32x128xf32>
    %c0_7 = arith.constant 0 : index
    %c0_8 = arith.constant 0 : index
    %c0_9 = arith.constant 0 : index
    %11 = vector.load %arg4[%c0_7, %c0_8, %c0_9] : memref<2x32x32xf32, #tpu.memory_space<vmem>>, vector<1x32x32xf32>
    %12 = vector.shape_cast %11 : vector<1x32x32xf32> to vector<32x32xf32>
    %cst_10 = arith.constant dense<0.000000e+00> : vector<32x128xf32>
    %13 = tpu.matmul %12, %10, %cst_10 {dimension_numbers = #tpu.dot_dimension_numbers<[1], [0], [0], [1], [0, 0, 1, 1], [], []>} : vector<32x32xf32>, vector<32x128xf32>, vector<32x128xf32> -> vector<32x128xf32>
    %c0_11 = arith.constant 0 : index
    %c0_12 = arith.constant 0 : index
    %c0_13 = arith.constant 0 : index
    %14 = vector.load %arg5[%c0_11, %c0_12, %c0_13] : memref<2x32x1xf32, #tpu.memory_space<vmem>>, vector<1x32x1xf32>
    %15 = vector.shape_cast %14 : vector<1x32x1xf32> to vector<32x1xf32>
    %16 = vector.broadcast %15 : vector<32x1xf32> to vector<32x128xf32>
    %17 = arith.addf %13, %16 : vector<32x128xf32>
    %cst_14 = arith.constant 0.000000e+00 : f32
    %18 = vector.broadcast %cst_14 : f32 to vector<32x128xf32>
    %19 = arith.cmpf ogt, %17, %18 : vector<32x128xf32>
    %cst_15 = arith.constant 2.000000e-01 : f32
    %20 = vector.broadcast %cst_15 : f32 to vector<32x128xf32>
    %21 = arith.mulf %20, %17 : vector<32x128xf32>
    %22 = arith.select %19, %17, %21 : vector<32x128xi1>, vector<32x128xf32>
    %c1 = arith.constant 1 : index
    %c0_16 = arith.constant 0 : index
    %c0_17 = arith.constant 0 : index
    %23 = vector.load %arg4[%c1, %c0_16, %c0_17] : memref<2x32x32xf32, #tpu.memory_space<vmem>>, vector<1x32x32xf32>
    %24 = vector.shape_cast %23 : vector<1x32x32xf32> to vector<32x32xf32>
    %cst_18 = arith.constant dense<0.000000e+00> : vector<32x128xf32>
    %25 = tpu.matmul %24, %22, %cst_18 {dimension_numbers = #tpu.dot_dimension_numbers<[1], [0], [0], [1], [0, 0, 1, 1], [], []>} : vector<32x32xf32>, vector<32x128xf32>, vector<32x128xf32> -> vector<32x128xf32>
    %c1_19 = arith.constant 1 : index
    %c0_20 = arith.constant 0 : index
    %c0_21 = arith.constant 0 : index
    %26 = vector.load %arg5[%c1_19, %c0_20, %c0_21] : memref<2x32x1xf32, #tpu.memory_space<vmem>>, vector<1x32x1xf32>
    %27 = vector.shape_cast %26 : vector<1x32x1xf32> to vector<32x1xf32>
    %28 = vector.broadcast %27 : vector<32x1xf32> to vector<32x128xf32>
    %29 = arith.addf %25, %28 : vector<32x128xf32>
    %cst_22 = arith.constant 0.000000e+00 : f32
    %30 = vector.broadcast %cst_22 : f32 to vector<32x128xf32>
    %31 = arith.cmpf ogt, %29, %30 : vector<32x128xf32>
    %cst_23 = arith.constant 2.000000e-01 : f32
    %32 = vector.broadcast %cst_23 : f32 to vector<32x128xf32>
    %33 = arith.mulf %32, %29 : vector<32x128xf32>
    %34 = arith.select %31, %29, %33 : vector<32x128xi1>, vector<32x128xf32>
    %c0_24 = arith.constant 0 : index
    %c0_25 = arith.constant 0 : index
    %35 = vector.load %arg6[%c0_24, %c0_25] : memref<9x32xf32, #tpu.memory_space<vmem>>, vector<9x32xf32>
    %cst_26 = arith.constant dense<0.000000e+00> : vector<9x128xf32>
    %36 = tpu.matmul %35, %34, %cst_26 {dimension_numbers = #tpu.dot_dimension_numbers<[1], [0], [0], [1], [0, 0, 1, 1], [], []>} : vector<9x32xf32>, vector<32x128xf32>, vector<9x128xf32> -> vector<9x128xf32>
    %c0_27 = arith.constant 0 : index
    %c0_28 = arith.constant 0 : index
    %37 = vector.load %arg7[%c0_27, %c0_28] : memref<9x1xf32, #tpu.memory_space<vmem>>, vector<9x1xf32>
    %38 = vector.broadcast %37 : vector<9x1xf32> to vector<9x128xf32>
    %39 = arith.addf %36, %38 : vector<9x128xf32>
    %40 = vector.extract_strided_slice %39 {offsets = [0, 0], sizes = [8, 128], strides = [1, 1]} : vector<9x128xf32> to vector<8x128xf32>
    %41 = math.tanh %40 : vector<8x128xf32>
    %c0_29 = arith.constant 0 : index
    %c0_30 = arith.constant 0 : index
    %42 = vector.load %arg8[%c0_29, %c0_30] : memref<9x128xf32, #tpu.memory_space<vmem>>, vector<8x128xf32>
    tpu.vector_store %arg8[%c0_29, %c0_30], %41 {strides = array<i32>} : memref<9x128xf32, #tpu.memory_space<vmem>>, vector<8x128xf32>,
    %43 = vector.extract_strided_slice %39 {offsets = [8, 0], sizes = [1, 128], strides = [1, 1]} : vector<9x128xf32> to vector<1x128xf32>
    %44 = arith.negf %43 : vector<1x128xf32>
    %45 = math.exp %44 : vector<1x128xf32>
    %cst_31 = arith.constant 1.000000e+00 : f32
    %46 = vector.broadcast %cst_31 : f32 to vector<1x128xf32>
    %47 = arith.addf %46, %45 : vector<1x128xf32>
    %48 = arith.divf %46, %47 : vector<1x128xf32>
    %c8 = arith.constant 8 : index
    %c0_32 = arith.constant 0 : index
    %49 = vector.load %arg8[%c8, %c0_32] : memref<9x128xf32, #tpu.memory_space<vmem>>, vector<1x128xf32>
    tpu.vector_store %arg8[%c8, %c0_32], %48 {strides = array<i32>} : memref<9x128xf32, #tpu.memory_space<vmem>>, vector<1x128xf32>,
    return
  }
  func.func @transform_0(%arg0: i32) -> (i32, i32) {
    %c0_i32 = arith.constant 0 : i32
    %c0_i32_0 = arith.constant 0 : i32
    return %arg0, %c0_i32 : i32, i32
  }
  func.func @transform_1(%arg0: i32) -> (i32, i32) {
    %c0_i32 = arith.constant 0 : i32
    %c0_i32_0 = arith.constant 0 : i32
    %c0_i32_1 = arith.constant 0 : i32
    return %c0_i32, %c0_i32_0 : i32, i32
  }
  func.func @transform_2(%arg0: i32) -> (i32, i32) {
    %c0_i32 = arith.constant 0 : i32
    %c0_i32_0 = arith.constant 0 : i32
    %c0_i32_1 = arith.constant 0 : i32
    return %c0_i32, %c0_i32_0 : i32, i32
  }
  func.func @transform_3(%arg0: i32) -> (i32, i32, i32) {
    %c0_i32 = arith.constant 0 : i32
    %c0_i32_0 = arith.constant 0 : i32
    %c0_i32_1 = arith.constant 0 : i32
    %c0_i32_2 = arith.constant 0 : i32
    return %c0_i32, %c0_i32_0, %c0_i32_1 : i32, i32, i32
  }
  func.func @transform_4(%arg0: i32) -> (i32, i32, i32) {
    %c0_i32 = arith.constant 0 : i32
    %c0_i32_0 = arith.constant 0 : i32
    %c0_i32_1 = arith.constant 0 : i32
    %c0_i32_2 = arith.constant 0 : i32
    return %c0_i32, %c0_i32_0, %c0_i32_1 : i32, i32, i32
  }
  func.func @transform_5(%arg0: i32) -> (i32, i32) {
    %c0_i32 = arith.constant 0 : i32
    %c0_i32_0 = arith.constant 0 : i32
    %c0_i32_1 = arith.constant 0 : i32
    return %c0_i32, %c0_i32_0 : i32, i32
  }
  func.func @transform_6(%arg0: i32) -> (i32, i32) {
    %c0_i32 = arith.constant 0 : i32
    %c0_i32_0 = arith.constant 0 : i32
    %c0_i32_1 = arith.constant 0 : i32
    return %c0_i32, %c0_i32_0 : i32, i32
  }
  func.func @transform_7(%arg0: i32) -> (i32, i32) {
    %c0_i32 = arith.constant 0 : i32
    %c0_i32_0 = arith.constant 0 : i32
    return %c0_i32, %arg0 : i32, i32
  }
}

</mosaic_0001>

<llo_original>
// kernel: generalized_predictor_forward.1
$region0: #{generalized_predictor_forward.1}
  #allocation0 [shape = 'u32[]', space=smem, size = 0x4, offset = 0x4, fixed_abs, tag = 'smem constant byte address 0x4 - core index']
  #allocation1 [shape = 'u32[144,128]{1,0:T(1,128)}', space=vmem, size = 0x12000, scoped, tag = 'internal scratch']
  %s0 = inlined_call_operand.vmem [shape: f32[256,32], index: 0, kind: input, shape index: {}]
  %s1 = inlined_call_operand.vmem [shape: f32[32,32], index: 1, kind: input, shape index: {}]
  %s2 = inlined_call_operand.vmem [shape: f32[32,1], index: 2, kind: input, shape index: {}]
  %s3 = inlined_call_operand.vmem [shape: f32[2,32,32], index: 3, kind: input, shape index: {}]
  %s4 = inlined_call_operand.vmem [shape: f32[2,32,1], index: 4, kind: input, shape index: {}]
  %s5 = inlined_call_operand.vmem [shape: f32[9,32], index: 5, kind: input, shape index: {}]
  %s6 = inlined_call_operand.vmem [shape: f32[9,1], index: 6, kind: input, shape index: {}]
  %s7 = inlined_call_operand.vmem [shape: f32[9,256], index: 7, kind: output, shape index: {}]
  %s8 = sld [smem:[#allocation0]]
  $region95: #{generalized_predictor_forward.1} parent=0
    _
  %s10 = ssub.s32 1, %s8
  %s11 = scalar_select 0, %s10, %s8
  $region1: #{generalized_predictor_forward.1} parent=0
    #allocation2 [shape = 'u8[16384]{0}', space=vmem, size = 0x4000, scoped, tag = 'output window, operand 0']
    loop: start=0, step=1, limit=4
    $region2: #{generalized_predictor_forward.1} parent=1 // loop_pre_header
      _
    $region3: #{generalized_predictor_forward.1} parent=1 // loop_header
      %s13 = sphi 0, %s17
      %p14 = scmp.ge.s32.totalorder %s13, 4
      %s23 = sphi 0, %s25
      %s26 = sphi 0, %s23
      %s27 = sphi 0, %s26
      %s43 = sphi 0, %s27
      %s47 = sphi 0, %s47
      %s49 = sphi 0, %s47
      %s50 = sphi 0, %s49
      %s64 = sphi 0, %s50
      %s68 = sphi 0, %s68
      %s70 = sphi 0, %s68
      %s71 = sphi 0, %s70
      %s85 = sphi 0, %s71
      %s89 = sphi 0, %s89
      %s91 = sphi 0, %s89
      %s92 = sphi 0, %s91
      %s106 = sphi 0, %s92
      %s110 = sphi 0, %s110
      %s112 = sphi 0, %s110
      %s113 = sphi 0, %s112
      %s127 = sphi 0, %s113
      %s131 = sphi 0, %s131
      %s133 = sphi 0, %s131
      %s134 = sphi 0, %s133
      %s148 = sphi 0, %s134
      %s152 = sphi 0, %s152
      %s154 = sphi 0, %s152
      %s155 = sphi 0, %s154
      %s169 = sphi 0, %s155
      %s175 = sphi 0, %s177
      %s178 = sphi 0, %s175
      %s179 = sphi 0, %s178
      %s195 = sphi 0, %s179
    $region4: #{generalized_predictor_forward.1} parent=1 // loop_header_branch
      %16 = sbr.rel (%p14) target = $region8
    $region5: #{generalized_predictor_forward.1} parent=1 // loop_body
      %s18 = ssub.s32 %s13, 1
      %s19 = ssub.s32 %s13, 2
      %s20 = sadd.s32 %s13, 1
      %s21 = ssub.s32 %s13, %s20
      %p22 = scmp.eq.s32.totalorder %s21, 0
      %s24 = sadd.s32 %s23, 1
      %s25 = scalar_select %p22, %s23, %s24
      %p28 = pneg %p22
      %p29 = scmp.eq.s32.totalorder %s13, 1
      %p30 = por %p28, %p29
      %p31 = scmp.ne.s32.totalorder %s23, %s26
      %p32 = scmp.eq.s32.totalorder %s13, 0
      %p33 = por %p31, %p32
      %p34 = scmp.ne.s32.totalorder %s23, %s26
      %p35 = scmp.eq.s32.totalorder %s18, 1
      %p36 = por %p34, %p35
      %p37 = scmp.ne.s32.totalorder %s26, %s27
      %p38 = scmp.eq.s32.totalorder %s18, 0
      %p39 = por %p37, %p38
      %p40 = scmp.ne.s32.totalorder %s26, %s27
      %p41 = scmp.eq.s32.totalorder %s19, 1
      %p42 = por %p40, %p41
      %p44 = scmp.ne.s32.totalorder %s27, %s43
      %p45 = scmp.eq.s32.totalorder %s19, 0
      %p46 = por %p44, %p45
      %s48 = sadd.s32 %s47, 1
      %p51 = scmp.eq.s32.totalorder %s13, 1
      %p52 = scmp.ne.s32.totalorder %s47, %s49
      %p53 = scmp.eq.s32.totalorder %s13, 0
      %p54 = por %p52, %p53
      %p55 = scmp.ne.s32.totalorder %s47, %s49
      %p56 = scmp.eq.s32.totalorder %s18, 1
      %p57 = por %p55, %p56
      %p58 = scmp.ne.s32.totalorder %s49, %s50
      %p59 = scmp.eq.s32.totalorder %s18, 0
      %p60 = por %p58, %p59
      %p61 = scmp.ne.s32.totalorder %s49, %s50
      %p62 = scmp.eq.s32.totalorder %s19, 1
      %p63 = por %p61, %p62
      %p65 = scmp.ne.s32.totalorder %s50, %s64
      %p66 = scmp.eq.s32.totalorder %s19, 0
      %p67 = por %p65, %p66
      %s69 = sadd.s32 %s68, 1
      %p72 = scmp.eq.s32.totalorder %s13, 1
      %p73 = scmp.ne.s32.totalorder %s68, %s70
      %p74 = scmp.eq.s32.totalorder %s13, 0
      %p75 = por %p73, %p74
      %p76 = scmp.ne.s32.totalorder %s68, %s70
      %p77 = scmp.eq.s32.totalorder %s18, 1
      %p78 = por %p76, %p77
      %p79 = scmp.ne.s32.totalorder %s70, %s71
      %p80 = scmp.eq.s32.totalorder %s18, 0
      %p81 = por %p79, %p80
      %p82 = scmp.ne.s32.totalorder %s70, %s71
      %p83 = scmp.eq.s32.totalorder %s19, 1
      %p84 = por %p82, %p83
      %p86 = scmp.ne.s32.totalorder %s71, %s85
      %p87 = scmp.eq.s32.totalorder %s19, 0
      %p88 = por %p86, %p87
      %s90 = sadd.s32 %s89, 1
      %p93 = scmp.eq.s32.totalorder %s13, 1
      %p94 = scmp.ne.s32.totalorder %s89, %s91
      %p95 = scmp.eq.s32.totalorder %s13, 0
      %p96 = por %p94, %p95
      %p97 = scmp.ne.s32.totalorder %s89, %s91
      %p98 = scmp.eq.s32.totalorder %s18, 1
      %p99 = por %p97, %p98
      %p100 = scmp.ne.s32.totalorder %s91, %s92
      %p101 = scmp.eq.s32.totalorder %s18, 0
      %p102 = por %p100, %p101
      %p103 = scmp.ne.s32.totalorder %s91, %s92
      %p104 = scmp.eq.s32.totalorder %s19, 1
      %p105 = por %p103, %p104
      %p107 = scmp.ne.s32.totalorder %s92, %s106
      %p108 = scmp.eq.s32.totalorder %s19, 0
      %p109 = por %p107, %p108
      %s111 = sadd.s32 %s110, 1
      %p114 = scmp.eq.s32.totalorder %s13, 1
      %p115 = scmp.ne.s32.totalorder %s110, %s112
      %p116 = scmp.eq.s32.totalorder %s13, 0
      %p117 = por %p115, %p116
      %p118 = scmp.ne.s32.totalorder %s110, %s112
      %p119 = scmp.eq.s32.totalorder %s18, 1
      %p120 = por %p118, %p119
      %p121 = scmp.ne.s32.totalorder %s112, %s113
      %p122 = scmp.eq.s32.totalorder %s18, 0
      %p123 = por %p121, %p122
      %p124 = scmp.ne.s32.totalorder %s112, %s113
      %p125 = scmp.eq.s32.totalorder %s19, 1
      %p126 = por %p124, %p125
      %p128 = scmp.ne.s32.totalorder %s113, %s127
      %p129 = scmp.eq.s32.totalorder %s19, 0
      %p130 = por %p128, %p129
      %s132 = sadd.s32 %s131, 1
      %p135 = scmp.eq.s32.totalorder %s13, 1
      %p136 = scmp.ne.s32.totalorder %s131, %s133
      %p137 = scmp.eq.s32.totalorder %s13, 0
      %p138 = por %p136, %p137
      %p139 = scmp.ne.s32.totalorder %s131, %s133
      %p140 = scmp.eq.s32.totalorder %s18, 1
      %p141 = por %p139, %p140
      %p142 = scmp.ne.s32.totalorder %s133, %s134
      %p143 = scmp.eq.s32.totalorder %s18, 0
      %p144 = por %p142, %p143
      %p145 = scmp.ne.s32.totalorder %s133, %s134
      %p146 = scmp.eq.s32.totalorder %s19, 1
      %p147 = por %p145, %p146
      %p149 = scmp.ne.s32.totalorder %s134, %s148
      %p150 = scmp.eq.s32.totalorder %s19, 0
      %p151 = por %p149, %p150
      %s153 = sadd.s32 %s152, 1
      %p156 = scmp.eq.s32.totalorder %s13, 1
      %p157 = scmp.ne.s32.totalorder %s152, %s154
      %p158 = scmp.eq.s32.totalorder %s13, 0
      %p159 = por %p157, %p158
      %p160 = scmp.ne.s32.totalorder %s152, %s154
      %p161 = scmp.eq.s32.totalorder %s18, 1
      %p162 = por %p160, %p161
      %p163 = scmp.ne.s32.totalorder %s154, %s155
      %p164 = scmp.eq.s32.totalorder %s18, 0
      %p165 = por %p163, %p164
      %p166 = scmp.ne.s32.totalorder %s154, %s155
      %p167 = scmp.eq.s32.totalorder %s19, 1
      %p168 = por %p166, %p167
      %p170 = scmp.ne.s32.totalorder %s155, %s169
      %p171 = scmp.eq.s32.totalorder %s19, 0
      %p172 = por %p170, %p171
      %s173 = ssub.s32 %s13, %s20
      %p174 = scmp.eq.s32.totalorder %s173, 0
      %s176 = sadd.s32 %s175, 1
      %s177 = scalar_select %p174, %s175, %s176
      %p180 = pneg %p174
      %p181 = scmp.eq.s32.totalorder %s13, 1
      %p182 = por %p180, %p181
      %p183 = scmp.ne.s32.totalorder %s175, %s178
      %p184 = scmp.eq.s32.totalorder %s13, 0
      %p185 = por %p183, %p184
      %p186 = scmp.ne.s32.totalorder %s175, %s178
      %p187 = scmp.eq.s32.totalorder %s18, 1
      %p188 = por %p186, %p187
      %p189 = scmp.ne.s32.totalorder %s178, %s179
      %p190 = scmp.eq.s32.totalorder %s18, 0
      %p191 = por %p189, %p190
      %p192 = scmp.ne.s32.totalorder %s178, %s179
      %p193 = scmp.eq.s32.totalorder %s19, 1
      %p194 = por %p192, %p193
      %p196 = scmp.ne.s32.totalorder %s179, %s195
      %p197 = scmp.eq.s32.totalorder %s19, 0
      %p198 = por %p196, %p197
      %p199 = scmp.le.s32.totalorder 1, %s13
      %p200 = scmp.lt.s32.totalorder %s13, 3
      %p201 = pnand %p199, %p200
      %p202 = pneg %p201
      // Predicated region
      $region9: #{generalized_predictor_forward.1} parent=5 // pred_check
        _
      $region10: #{generalized_predictor_forward.1} parent=5 // pred_check_branch
        %204 = sbr.rel (%p201) target = $region12
      $region11: #{generalized_predictor_forward.1} parent=5 // pred_region
        %s205 = ssub.s32 %s13, 1
        // Predicated region
        $region13: #{generalized_predictor_forward.1} parent=11 // pred_check
          %p206 = pneg %p60
        $region14: #{generalized_predictor_forward.1} parent=11 // pred_check_branch
          %208 = sbr.rel (%p206) target = $region16
        $region15: #{generalized_predictor_forward.1} parent=11 // pred_region
          _
        $region16: #{generalized_predictor_forward.1} parent=11 // pred_fallthru
          _
        // Predicated region
        $region17: #{generalized_predictor_forward.1} parent=11 // pred_check
          %p209 = pneg %p81
        $region18: #{generalized_predictor_forward.1} parent=11 // pred_check_branch
          %211 = sbr.rel (%p209) target = $region20
        $region19: #{generalized_predictor_forward.1} parent=11 // pred_region
          _
        $region20: #{generalized_predictor_forward.1} parent=11 // pred_fallthru
          _
        // Predicated region
        $region21: #{generalized_predictor_forward.1} parent=11 // pred_check
          %p212 = pneg %p102
        $region22: #{generalized_predictor_forward.1} parent=11 // pred_check_branch
          %214 = sbr.rel (%p212) target = $region24
        $region23: #{generalized_predictor_forward.1} parent=11 // pred_region
          _
        $region24: #{generalized_predictor_forward.1} parent=11 // pred_fallthru
          _
        // Predicated region
        $region25: #{generalized_predictor_forward.1} parent=11 // pred_check
          %p215 = pneg %p123
        $region26: #{generalized_predictor_forward.1} parent=11 // pred_check_branch
          %217 = sbr.rel (%p215) target = $region28
        $region27: #{generalized_predictor_forward.1} parent=11 // pred_region
          _
        $region28: #{generalized_predictor_forward.1} parent=11 // pred_fallthru
          _
        // Predicated region
        $region29: #{generalized_predictor_forward.1} parent=11 // pred_check
          %p218 = pneg %p144
        $region30: #{generalized_predictor_forward.1} parent=11 // pred_check_branch
          %220 = sbr.rel (%p218) target = $region32
        $region31: #{generalized_predictor_forward.1} parent=11 // pred_region
          _
        $region32: #{generalized_predictor_forward.1} parent=11 // pred_fallthru
          _
        // Predicated region
        $region33: #{generalized_predictor_forward.1} parent=11 // pred_check
          %p221 = pneg %p165
        $region34: #{generalized_predictor_forward.1} parent=11 // pred_check_branch
          %223 = sbr.rel (%p221) target = $region36
        $region35: #{generalized_predictor_forward.1} parent=11 // pred_region
          _
        $region36: #{generalized_predictor_forward.1} parent=11 // pred_fallthru
          _
      $region12: #{generalized_predictor_forward.1} parent=5 // pred_fallthru
        _
      %p224 = scmp.lt.s32.totalorder %s13, 2
      // Predicated region
      $region37: #{generalized_predictor_forward.1} parent=5 // pred_check
        %p225 = pneg %p224
      $region38: #{generalized_predictor_forward.1} parent=5 // pred_check_branch
        %227 = sbr.rel (%p225) target = $region40
      $region39: #{generalized_predictor_forward.1} parent=5 // pred_region
        // Predicated region
        $region41: #{generalized_predictor_forward.1} parent=39 // pred_check
          %p228 = pneg %p33
        $region42: #{generalized_predictor_forward.1} parent=39 // pred_check_branch
          %230 = sbr.rel (%p228) target = $region44
        $region43: #{generalized_predictor_forward.1} parent=39 // pred_region
          %s231 = smul.u32 16, %s13
          %p232 = scmp.lt.s32.totalorder %s231, 31
          %s233 = scalar_select %p232, %s231, 31
          %s234 = smul.addr %s233, 8
          %s235 = scalar_lea.vmem %s0, %s234
          %s236 = smul.u32 16, %s13
        $region44: #{generalized_predictor_forward.1} parent=39 // pred_fallthru
          _
      $region40: #{generalized_predictor_forward.1} parent=5 // pred_fallthru
        _
      %p237 = scmp.le.s32.totalorder 1, %s13
      %p238 = scmp.lt.s32.totalorder %s13, 3
      %p239 = pnand %p237, %p238
      %p240 = pneg %p239
      // Predicated region
      $region45: #{generalized_predictor_forward.1} parent=5 // pred_check
        _
      $region46: #{generalized_predictor_forward.1} parent=5 // pred_check_branch
        %242 = sbr.rel (%p239) target = $region48
      $region47: #{generalized_predictor_forward.1} parent=5 // pred_region
        %s243 = ssub.s32 %s13, 1
        %s244 = smul.u32 16, %s18
        %p245 = scmp.lt.s32.totalorder %s244, 31
        %s246 = scalar_select %p245, %s244, 31
        %s247 = smul.addr %s246, 8
        %s248 = scalar_lea.vmem %s0, %s247
        %p249 = pneg %p39
        %p250 = pneg %p36
        %p251 = pneg %p60
        %p252 = pneg %p57
        %p253 = pneg %p81
        %p254 = pneg %p78
        %p255 = pneg %p102
        %p256 = pneg %p99
        %p257 = pneg %p123
        %p258 = pneg %p120
        %p259 = pneg %p144
        %p260 = pneg %p141
        %p261 = pneg %p165
        %p262 = pneg %p162
        %p263 = pneg %p191
        %p264 = pneg %p188
        %s265 = sand.u32 %s178, 1
        %s266 = sand.u32 %s178, 1
        %s267 = smul.addr %s266, 16
        %s268 = scalar_lea.vmem [#allocation2], %s267
        %s269 = smul.u32 16, %s18
        %p270 = scmp.lt.s32.totalorder %s269, 31
        %s271 = scalar_select %p270, %s269, 31
        %s272 = smul.addr %s271, 8
        %s273 = scalar_lea.vmem %s0, %s272
        %s274 = smul.u32 16, %s18
        %v275 = vld [vmem:[%s1] sm:$0xff]
        %v276 = vld [vmem:[%s1 + $0x8] sm:$0xff]
        %v277 = vld [vmem:[%s1 + $0x10] sm:$0xff]
        %v278 = vld [vmem:[%s1 + $0x18] sm:$0xff]
        %v279 = vld [vmem:[%s273] sm:$0xff]
        %v280 = vld [vmem:[%s273 + $0x8] sm:$0xff]
        %v281 = vld [vmem:[%s273 + $0x10] sm:$0xff]
        %v282 = vld [vmem:[%s273 + $0x18] sm:$0xff]
        %v283 = vld [vmem:[%s273 + $0x20] sm:$0xff]
        %v284 = vld [vmem:[%s273 + $0x28] sm:$0xff]
        %v285 = vld [vmem:[%s273 + $0x30] sm:$0xff]
        %v286 = vld [vmem:[%s273 + $0x38] sm:$0xff]
        %v287 = vld [vmem:[%s273 + $0x40] sm:$0xff]
        %v288 = vld [vmem:[%s273 + $0x48] sm:$0xff]
        %v289 = vld [vmem:[%s273 + $0x50] sm:$0xff]
        %v290 = vld [vmem:[%s273 + $0x58] sm:$0xff]
        %v291 = vld [vmem:[%s273 + $0x60] sm:$0xff]
        %v292 = vld [vmem:[%s273 + $0x68] sm:$0xff]
        %v293 = vld [vmem:[%s273 + $0x70] sm:$0xff]
        %v294 = vld [vmem:[%s273 + $0x78] sm:$0xff]
        %v295 = vld [vmem:[%s2] sm:$0xff]
        %v296 = vld [vmem:[%s2 + $0x8] sm:$0xff]
        %v297 = vld [vmem:[%s2 + $0x10] sm:$0xff]
        %v298 = vld [vmem:[%s2 + $0x18] sm:$0xff]
        %300 = vset.pattern.permute.xlu0 0
        %301 = vperm.xlu0 %300, %v295
        %v302 = vpop.permute.xlu0 %301
        %305 = vset.pattern.permute.xlu0 0
        %306 = vperm.xlu0 %305, %v296
        %v307 = vpop.permute.xlu0 %306
        %310 = vset.pattern.permute.xlu0 0
        %311 = vperm.xlu0 %310, %v297
        %v312 = vpop.permute.xlu0 %311
        %315 = vset.pattern.permute.xlu0 0
        %316 = vperm.xlu0 %315, %v298
        %v317 = vpop.permute.xlu0 %316
        %vm319 = vcmask 261120
        %v321 = vsel %vm319, %v275, 0
        %v324 = vsel %vm319, %v276, 0
        %v327 = vsel %vm319, %v277, 0
        %v330 = vsel %vm319, %v278, 0
        %v333 = vsel %vm319, %v279, 0
        %v336 = vsel %vm319, %v280, 0
        %v339 = vsel %vm319, %v281, 0
        %v342 = vsel %vm319, %v282, 0
        %v345 = vsel %vm319, %v283, 0
        %v348 = vsel %vm319, %v284, 0
        %v351 = vsel %vm319, %v285, 0
        %v354 = vsel %vm319, %v286, 0
        %v357 = vsel %vm319, %v287, 0
        %v360 = vsel %vm319, %v288, 0
        %v363 = vsel %vm319, %v289, 0
        %v366 = vsel %vm319, %v290, 0
        %v369 = vsel %vm319, %v291, 0
        %v372 = vsel %vm319, %v292, 0
        %v375 = vsel %vm319, %v293, 0
        %v378 = vsel %vm319, %v294, 0
        %380 = vmatprep.subr.mxu0 0.0
        %381 = vmatpush1.xpose.msra.mxu0 %v333
        %382 = vmatprep.subr.mxu0 0.0
        %383 = vmatpush1.xpose.msra.mxu0 %v336
        %384 = vmatprep.subr.mxu0 0.0
        %385 = vmatpush1.xpose.msra.mxu0 %v339
        %386 = vmatprep.subr.mxu0 0.0
        %387 = vmatpush1.xpose.msra.mxu0 %v342
        %388 = vmatprep.subr.mxu0 0.0
        %389 = vmatpush1.xpose.msra.mxu0 %v345
        %390 = vmatprep.subr.mxu0 0.0
        %391 = vmatpush1.xpose.msra.mxu0 %v348
        %392 = vmatprep.subr.mxu0 0.0
        %393 = vmatpush1.xpose.msra.mxu0 %v351
        %394 = vmatprep.subr.mxu0 0.0
        %395 = vmatpush1.xpose.msra.mxu0 %v354
        %396 = vmatprep.subr.mxu0 0.0
        %397 = vmatpush1.xpose.msra.mxu0 %v357
        %398 = vmatprep.subr.mxu0 0.0
        %399 = vmatpush1.xpose.msra.mxu0 %v360
        %400 = vmatprep.subr.mxu0 0.0
        %401 = vmatpush1.xpose.msra.mxu0 %v363
        %402 = vmatprep.subr.mxu0 0.0
        %403 = vmatpush1.xpose.msra.mxu0 %v366
        %404 = vmatprep.subr.mxu0 0.0
        %405 = vmatpush1.xpose.msra.mxu0 %v369
        %406 = vmatprep.subr.mxu0 0.0
        %407 = vmatpush1.xpose.msra.mxu0 %v372
        %408 = vmatprep.subr.mxu0 0.0
        %409 = vmatpush1.xpose.msra.mxu0 %v375
        %410 = vmatprep.subr.mxu0 0.0
        %411 = vmatpush1.xpose.msra.mxu0 %v378
        %412 = vmatprep.subr.mxu0 0.0
        %413 = vmatpush1.xpose.msra.mxu0 0.0
        %414 = vmatprep.subr.mxu0 0.0
        %415 = vmatpush1.xpose.msra.mxu0 0.0
        %416 = vmatprep.subr.mxu0 0.0
        %417 = vmatpush1.xpose.msra.mxu0 0.0
        %418 = vmatprep.subr.mxu0 0.0
        %419 = vmatpush1.xpose.msra.mxu0 0.0
        %420 = vmatprep.subr.mxu0 0.0
        %421 = vmatpush1.xpose.msra.mxu0 0.0
        %422 = vmatprep.subr.mxu0 0.0
        %423 = vmatpush1.xpose.msra.mxu0 0.0
        %424 = vmatprep.subr.mxu0 0.0
        %425 = vmatpush1.xpose.msra.mxu0 0.0
        %426 = vmatprep.subr.mxu0 0.0
        %427 = vmatpush1.xpose.msra.mxu0 0.0
        %428 = vmatprep.subr.mxu0 0.0
        %429 = vmatpush1.xpose.msra.mxu0 0.0
        %430 = vmatprep.subr.mxu0 0.0
        %431 = vmatpush1.xpose.msra.mxu0 0.0
        %432 = vmatprep.subr.mxu0 0.0
        %433 = vmatpush1.xpose.msra.mxu0 0.0
        %434 = vmatprep.subr.mxu0 0.0
        %435 = vmatpush1.xpose.msra.mxu0 0.0
        %436 = vmatprep.subr.mxu0 0.0
        %437 = vmatpush1.xpose.msra.mxu0 0.0
        %438 = vmatprep.subr.mxu0 0.0
        %439 = vmatpush1.xpose.msra.mxu0 0.0
        %440 = vmatprep.subr.mxu0 0.0
        %441 = vmatpush1.xpose.msra.mxu0 0.0
        %442 = vmatprep.subr.mxu0 0.0
        %443 = vmatpush1.xpose.msra.mxu0 0.0
        %444 = vmatprep.mubr.f32.mxu0 0.0
        %445 = vmatmul.mubr.f32.gmra.mrb[0].mxu0 %v321
        %v446 = vpop.f32.mrb[0].mxu0
        %v447 = vadd.f32 %v302, %v446
        %v448 = vpop.f32.mrb[0].mxu0
        %449 = vmatprep.mubr.f32.mxu0 0.0
        %450 = vmatmul.mubr.f32.gmra.mrb[0].mxu0 %v324
        %v451 = vpop.f32.mrb[0].mxu0
        %v452 = vadd.f32 %v307, %v451
        %v453 = vpop.f32.mrb[0].mxu0
        %454 = vmatprep.mubr.f32.mxu0 0.0
        %455 = vmatmul.mubr.f32.gmra.mrb[0].mxu0 %v327
        %v456 = vpop.f32.mrb[0].mxu0
        %v457 = vadd.f32 %v312, %v456
        %v458 = vpop.f32.mrb[0].mxu0
        %459 = vmatprep.mubr.f32.mxu0 0.0
        %460 = vmatmul.mubr.f32.gmra.mrb[0].mxu0 %v330
        %v461 = vpop.f32.mrb[0].mxu0
        %v462 = vadd.f32 %v317, %v461
        %v463 = vpop.f32.mrb[0].mxu0
        %464 = vdwg.mxu0
        %vm465 = vcmp.gt.f32.partialorder %v447, 0.0
        %vm466 = vcmp.gt.f32.partialorder %v452, 0.0
        %vm467 = vcmp.gt.f32.partialorder %v457, 0.0
        %vm468 = vcmp.gt.f32.partialorder %v462, 0.0
        %v469 = vmul.f32 %v447, 0.2
        %v470 = vmul.f32 %v452, 0.2
        %v471 = vmul.f32 %v457, 0.2
        %v472 = vmul.f32 %v462, 0.2
        %v473 = vsel %vm465, %v447, %v469
        %v474 = vsel %vm466, %v452, %v470
        %v475 = vsel %vm467, %v457, %v471
        %v476 = vsel %vm468, %v462, %v472
        %v477 = vld [vmem:[%s3] sm:$0xff]
        %v478 = vld [vmem:[%s3 + $0x8] sm:$0xff]
        %v479 = vld [vmem:[%s3 + $0x10] sm:$0xff]
        %v480 = vld [vmem:[%s3 + $0x18] sm:$0xff]
        %v481 = vld [vmem:[%s4] sm:$0xff]
        %v482 = vld [vmem:[%s4 + $0x8] sm:$0xff]
        %v483 = vld [vmem:[%s4 + $0x10] sm:$0xff]
        %v484 = vld [vmem:[%s4 + $0x18] sm:$0xff]
        %486 = vset.pattern.permute.xlu0 0
        %487 = vperm.xlu0 %486, %v481
        %v488 = vpop.permute.xlu0 %487
        %491 = vset.pattern.permute.xlu0 0
        %492 = vperm.xlu0 %491, %v482
        %v493 = vpop.permute.xlu0 %492
        %496 = vset.pattern.permute.xlu0 0
        %497 = vperm.xlu0 %496, %v483
        %v498 = vpop.permute.xlu0 %497
        %501 = vset.pattern.permute.xlu0 0
        %502 = vperm.xlu0 %501, %v484
        %v503 = vpop.permute.xlu0 %502
        %v506 = vsel %vm319, %v477, 0
        %v509 = vsel %vm319, %v478, 0
        %v512 = vsel %vm319, %v479, 0
        %v515 = vsel %vm319, %v480, 0
        %517 = vmatprep.subr.mxu0 0.0
        %518 = vmatpush1.msra.mxu0 %v473
        %519 = vmatprep.subr.mxu0 0.0
        %520 = vmatpush1.msra.mxu0 %v474
        %521 = vmatprep.subr.mxu0 0.0
        %522 = vmatpush1.msra.mxu0 %v475
        %523 = vmatprep.subr.mxu0 0.0
        %524 = vmatpush1.msra.mxu0 %v476
        %525 = vmatprep.subr.mxu0 0.0
        %526 = vmatpush1.msra.mxu0 0.0
        %527 = vmatprep.subr.mxu0 0.0
        %528 = vmatpush1.msra.mxu0 0.0
        %529 = vmatprep.subr.mxu0 0.0
        %530 = vmatpush1.msra.mxu0 0.0
        %531 = vmatprep.subr.mxu0 0.0
        %532 = vmatpush1.msra.mxu0 0.0
        %533 = vmatprep.subr.mxu0 0.0
        %534 = vmatpush1.msra.mxu0 0.0
        %535 = vmatprep.subr.mxu0 0.0
        %536 = vmatpush1.msra.mxu0 0.0
        %537 = vmatprep.subr.mxu0 0.0
        %538 = vmatpush1.msra.mxu0 0.0
        %539 = vmatprep.subr.mxu0 0.0
        %540 = vmatpush1.msra.mxu0 0.0
        %541 = vmatprep.subr.mxu0 0.0
        %542 = vmatpush1.msra.mxu0 0.0
        %543 = vmatprep.subr.mxu0 0.0
        %544 = vmatpush1.msra.mxu0 0.0
        %545 = vmatprep.subr.mxu0 0.0
        %546 = vmatpush1.msra.mxu0 0.0
        %547 = vmatprep.subr.mxu0 0.0
        %548 = vmatpush1.msra.mxu0 0.0
        %549 = vmatprep.subr.mxu0 0.0
        %550 = vmatpush1.msra.mxu0 0.0
        %551 = vmatprep.subr.mxu0 0.0
        %552 = vmatpush1.msra.mxu0 0.0
        %553 = vmatprep.subr.mxu0 0.0
        %554 = vmatpush1.msra.mxu0 0.0
        %555 = vmatprep.subr.mxu0 0.0
        %556 = vmatpush1.msra.mxu0 0.0
        %557 = vmatprep.subr.mxu0 0.0
        %558 = vmatpush1.msra.mxu0 0.0
        %559 = vmatprep.subr.mxu0 0.0
        %560 = vmatpush1.msra.mxu0 0.0
        %561 = vmatprep.subr.mxu0 0.0
        %562 = vmatpush1.msra.mxu0 0.0
        %563 = vmatprep.subr.mxu0 0.0
        %564 = vmatpush1.msra.mxu0 0.0
        %565 = vmatprep.subr.mxu0 0.0
        %566 = vmatpush1.msra.mxu0 0.0
        %567 = vmatprep.subr.mxu0 0.0
        %568 = vmatpush1.msra.mxu0 0.0
        %569 = vmatprep.subr.mxu0 0.0
        %570 = vmatpush1.msra.mxu0 0.0
        %571 = vmatprep.subr.mxu0 0.0
        %572 = vmatpush1.msra.mxu0 0.0
        %573 = vmatprep.subr.mxu0 0.0
        %574 = vmatpush1.msra.mxu0 0.0
        %575 = vmatprep.subr.mxu0 0.0
        %576 = vmatpush1.msra.mxu0 0.0
        %577 = vmatprep.subr.mxu0 0.0
        %578 = vmatpush1.msra.mxu0 0.0
        %579 = vmatprep.subr.mxu0 0.0
        %580 = vmatpush1.msra.mxu0 0.0
        %581 = vmatprep.mubr.f32.mxu0 0.0
        %582 = vmatmul.mubr.f32.gmra.mrb[0].mxu0 %v506
        %v583 = vpop.f32.mrb[0].mxu0
        %v584 = vadd.f32 %v488, %v583
        %v585 = vpop.f32.mrb[0].mxu0
        %586 = vmatprep.mubr.f32.mxu0 0.0
        %587 = vmatmul.mubr.f32.gmra.mrb[0].mxu0 %v509
        %v588 = vpop.f32.mrb[0].mxu0
        %v589 = vadd.f32 %v493, %v588
        %v590 = vpop.f32.mrb[0].mxu0
        %591 = vmatprep.mubr.f32.mxu0 0.0
        %592 = vmatmul.mubr.f32.gmra.mrb[0].mxu0 %v512
        %v593 = vpop.f32.mrb[0].mxu0
        %v594 = vadd.f32 %v498, %v593
        %v595 = vpop.f32.mrb[0].mxu0
        %596 = vmatprep.mubr.f32.mxu0 0.0
        %597 = vmatmul.mubr.f32.gmra.mrb[0].mxu0 %v515
        %v598 = vpop.f32.mrb[0].mxu0
        %v599 = vadd.f32 %v503, %v598
        %v600 = vpop.f32.mrb[0].mxu0
        %601 = vdwg.mxu0
        %vm602 = vcmp.gt.f32.partialorder %v584, 0.0
        %vm603 = vcmp.gt.f32.partialorder %v589, 0.0
        %vm604 = vcmp.gt.f32.partialorder %v594, 0.0
        %vm605 = vcmp.gt.f32.partialorder %v599, 0.0
        %v606 = vmul.f32 %v584, 0.2
        %v607 = vmul.f32 %v589, 0.2
        %v608 = vmul.f32 %v594, 0.2
        %v609 = vmul.f32 %v599, 0.2
        %v610 = vsel %vm602, %v584, %v606
        %v611 = vsel %vm603, %v589, %v607
        %v612 = vsel %vm604, %v594, %v608
        %v613 = vsel %vm605, %v599, %v609
        %s614 = scalar_lea.vmem %s3, 32
        %v615 = vld [vmem:[%s614] sm:$0xff]
        %v616 = vld [vmem:[%s614 + $0x8] sm:$0xff]
        %v617 = vld [vmem:[%s614 + $0x10] sm:$0xff]
        %v618 = vld [vmem:[%s614 + $0x18] sm:$0xff]
        %s619 = scalar_lea.vmem %s4, 32
        %v620 = vld [vmem:[%s619] sm:$0xff]
        %v621 = vld [vmem:[%s619 + $0x8] sm:$0xff]
        %v622 = vld [vmem:[%s619 + $0x10] sm:$0xff]
        %v623 = vld [vmem:[%s619 + $0x18] sm:$0xff]
        %625 = vset.pattern.permute.xlu0 0
        %626 = vperm.xlu0 %625, %v620
        %v627 = vpop.permute.xlu0 %626
        %630 = vset.pattern.permute.xlu0 0
        %631 = vperm.xlu0 %630, %v621
        %v632 = vpop.permute.xlu0 %631
        %635 = vset.pattern.permute.xlu0 0
        %636 = vperm.xlu0 %635, %v622
        %v637 = vpop.permute.xlu0 %636
        %640 = vset.pattern.permute.xlu0 0
        %641 = vperm.xlu0 %640, %v623
        %v642 = vpop.permute.xlu0 %641
        %v645 = vsel %vm319, %v615, 0
        %v648 = vsel %vm319, %v616, 0
        %v651 = vsel %vm319, %v617, 0
        %v654 = vsel %vm319, %v618, 0
        %656 = vmatprep.subr.mxu0 0.0
        %657 = vmatpush1.msra.mxu0 %v610
        %658 = vmatprep.subr.mxu0 0.0
        %659 = vmatpush1.msra.mxu0 %v611
        %660 = vmatprep.subr.mxu0 0.0
        %661 = vmatpush1.msra.mxu0 %v612
        %662 = vmatprep.subr.mxu0 0.0
        %663 = vmatpush1.msra.mxu0 %v613
        %664 = vmatprep.subr.mxu0 0.0
        %665 = vmatpush1.msra.mxu0 0.0
        %666 = vmatprep.subr.mxu0 0.0
        %667 = vmatpush1.msra.mxu0 0.0
        %668 = vmatprep.subr.mxu0 0.0
        %669 = vmatpush1.msra.mxu0 0.0
        %670 = vmatprep.subr.mxu0 0.0
        %671 = vmatpush1.msra.mxu0 0.0
        %672 = vmatprep.subr.mxu0 0.0
        %673 = vmatpush1.msra.mxu0 0.0
        %674 = vmatprep.subr.mxu0 0.0
        %675 = vmatpush1.msra.mxu0 0.0
        %676 = vmatprep.subr.mxu0 0.0
        %677 = vmatpush1.msra.mxu0 0.0
        %678 = vmatprep.subr.mxu0 0.0
        %679 = vmatpush1.msra.mxu0 0.0
        %680 = vmatprep.subr.mxu0 0.0
        %681 = vmatpush1.msra.mxu0 0.0
        %682 = vmatprep.subr.mxu0 0.0
        %683 = vmatpush1.msra.mxu0 0.0
        %684 = vmatprep.subr.mxu0 0.0
        %685 = vmatpush1.msra.mxu0 0.0
        %686 = vmatprep.subr.mxu0 0.0
        %687 = vmatpush1.msra.mxu0 0.0
        %688 = vmatprep.subr.mxu0 0.0
        %689 = vmatpush1.msra.mxu0 0.0
        %690 = vmatprep.subr.mxu0 0.0
        %691 = vmatpush1.msra.mxu0 0.0
        %692 = vmatprep.subr.mxu0 0.0
        %693 = vmatpush1.msra.mxu0 0.0
        %694 = vmatprep.subr.mxu0 0.0
        %695 = vmatpush1.msra.mxu0 0.0
        %696 = vmatprep.subr.mxu0 0.0
        %697 = vmatpush1.msra.mxu0 0.0
        %698 = vmatprep.subr.mxu0 0.0
        %699 = vmatpush1.msra.mxu0 0.0
        %700 = vmatprep.subr.mxu0 0.0
        %701 = vmatpush1.msra.mxu0 0.0
        %702 = vmatprep.subr.mxu0 0.0
        %703 = vmatpush1.msra.mxu0 0.0
        %704 = vmatprep.subr.mxu0 0.0
        %705 = vmatpush1.msra.mxu0 0.0
        %706 = vmatprep.subr.mxu0 0.0
        %707 = vmatpush1.msra.mxu0 0.0
        %708 = vmatprep.subr.mxu0 0.0
        %709 = vmatpush1.msra.mxu0 0.0
        %710 = vmatprep.subr.mxu0 0.0
        %711 = vmatpush1.msra.mxu0 0.0
        %712 = vmatprep.subr.mxu0 0.0
        %713 = vmatpush1.msra.mxu0 0.0
        %714 = vmatprep.subr.mxu0 0.0
        %715 = vmatpush1.msra.mxu0 0.0
        %716 = vmatprep.subr.mxu0 0.0
        %717 = vmatpush1.msra.mxu0 0.0
        %718 = vmatprep.subr.mxu0 0.0
        %719 = vmatpush1.msra.mxu0 0.0
        %720 = vmatprep.mubr.f32.mxu0 0.0
        %721 = vmatmul.mubr.f32.gmra.mrb[0].mxu0 %v645
        %v722 = vpop.f32.mrb[0].mxu0
        %v723 = vadd.f32 %v627, %v722
        %v724 = vpop.f32.mrb[0].mxu0
        %725 = vmatprep.mubr.f32.mxu0 0.0
        %726 = vmatmul.mubr.f32.gmra.mrb[0].mxu0 %v648
        %v727 = vpop.f32.mrb[0].mxu0
        %v728 = vadd.f32 %v632, %v727
        %v729 = vpop.f32.mrb[0].mxu0
        %730 = vmatprep.mubr.f32.mxu0 0.0
        %731 = vmatmul.mubr.f32.gmra.mrb[0].mxu0 %v651
        %v732 = vpop.f32.mrb[0].mxu0
        %v733 = vadd.f32 %v637, %v732
        %v734 = vpop.f32.mrb[0].mxu0
        %735 = vmatprep.mubr.f32.mxu0 0.0
        %736 = vmatmul.mubr.f32.gmra.mrb[0].mxu0 %v654
        %v737 = vpop.f32.mrb[0].mxu0
        %v738 = vadd.f32 %v642, %v737
        %v739 = vpop.f32.mrb[0].mxu0
        %740 = vdwg.mxu0
        %vm741 = vcmp.gt.f32.partialorder %v723, 0.0
        %vm742 = vcmp.gt.f32.partialorder %v728, 0.0
        %vm743 = vcmp.gt.f32.partialorder %v733, 0.0
        %vm744 = vcmp.gt.f32.partialorder %v738, 0.0
        %v745 = vmul.f32 %v723, 0.2
        %v746 = vmul.f32 %v728, 0.2
        %v747 = vmul.f32 %v733, 0.2
        %v748 = vmul.f32 %v738, 0.2
        %v749 = vsel %vm741, %v723, %v745
        %v750 = vsel %vm742, %v728, %v746
        %v751 = vsel %vm743, %v733, %v747
        %v752 = vsel %vm744, %v738, %v748
        %v753 = vld [vmem:[%s5] sm:$0xff]
        %v754 = vld [vmem:[%s5 + $0x8] sm:$0x1]
        %v755 = vld [vmem:[%s6] sm:$0xff]
        %v756 = vld [vmem:[%s6 + $0x8] sm:$0x1]
        %758 = vset.pattern.permute.xlu0 0
        %759 = vperm.xlu0 %758, %v755
        %v760 = vpop.permute.xlu0 %759
        %763 = vset.pattern.permute.xlu0 0
        %764 = vperm.xlu0 %763, %v756
        %v765 = vpop.permute.xlu0 %764
        %v768 = vsel %vm319, %v753, 0
        %v771 = vsel %vm319, %v754, 0
        %773 = vmatprep.subr.mxu0 0.0
        %774 = vmatpush1.msra.mxu0 %v749
        %775 = vmatprep.subr.mxu0 0.0
        %776 = vmatpush1.msra.mxu0 %v750
        %777 = vmatprep.subr.mxu0 0.0
        %778 = vmatpush1.msra.mxu0 %v751
        %779 = vmatprep.subr.mxu0 0.0
        %780 = vmatpush1.msra.mxu0 %v752
        %781 = vmatprep.subr.mxu0 0.0
        %782 = vmatpush1.msra.mxu0 0.0
        %783 = vmatprep.subr.mxu0 0.0
        %784 = vmatpush1.msra.mxu0 0.0
        %785 = vmatprep.subr.mxu0 0.0
        %786 = vmatpush1.msra.mxu0 0.0
        %787 = vmatprep.subr.mxu0 0.0
        %788 = vmatpush1.msra.mxu0 0.0
        %789 = vmatprep.subr.mxu0 0.0
        %790 = vmatpush1.msra.mxu0 0.0
        %791 = vmatprep.subr.mxu0 0.0
        %792 = vmatpush1.msra.mxu0 0.0
        %793 = vmatprep.subr.mxu0 0.0
        %794 = vmatpush1.msra.mxu0 0.0
        %795 = vmatprep.subr.mxu0 0.0
        %796 = vmatpush1.msra.mxu0 0.0
        %797 = vmatprep.subr.mxu0 0.0
        %798 = vmatpush1.msra.mxu0 0.0
        %799 = vmatprep.subr.mxu0 0.0
        %800 = vmatpush1.msra.mxu0 0.0
        %801 = vmatprep.subr.mxu0 0.0
        %802 = vmatpush1.msra.mxu0 0.0
        %803 = vmatprep.subr.mxu0 0.0
        %804 = vmatpush1.msra.mxu0 0.0
        %805 = vmatprep.subr.mxu0 0.0
        %806 = vmatpush1.msra.mxu0 0.0
        %807 = vmatprep.subr.mxu0 0.0
        %808 = vmatpush1.msra.mxu0 0.0
        %809 = vmatprep.subr.mxu0 0.0
        %810 = vmatpush1.msra.mxu0 0.0
        %811 = vmatprep.subr.mxu0 0.0
        %812 = vmatpush1.msra.mxu0 0.0
        %813 = vmatprep.subr.mxu0 0.0
        %814 = vmatpush1.msra.mxu0 0.0
        %815 = vmatprep.subr.mxu0 0.0
        %816 = vmatpush1.msra.mxu0 0.0
        %817 = vmatprep.subr.mxu0 0.0
        %818 = vmatpush1.msra.mxu0 0.0
        %819 = vmatprep.subr.mxu0 0.0
        %820 = vmatpush1.msra.mxu0 0.0
        %821 = vmatprep.subr.mxu0 0.0
        %822 = vmatpush1.msra.mxu0 0.0
        %823 = vmatprep.subr.mxu0 0.0
        %824 = vmatpush1.msra.mxu0 0.0
        %825 = vmatprep.subr.mxu0 0.0
        %826 = vmatpush1.msra.mxu0 0.0
        %827 = vmatprep.subr.mxu0 0.0
        %828 = vmatpush1.msra.mxu0 0.0
        %829 = vmatprep.subr.mxu0 0.0
        %830 = vmatpush1.msra.mxu0 0.0
        %831 = vmatprep.subr.mxu0 0.0
        %832 = vmatpush1.msra.mxu0 0.0
        %833 = vmatprep.subr.mxu0 0.0
        %834 = vmatpush1.msra.mxu0 0.0
        %835 = vmatprep.subr.mxu0 0.0
        %836 = vmatpush1.msra.mxu0 0.0
        %837 = vmatprep.mubr.f32.mxu0 0.0
        %838 = vmatmul.mubr.f32.gmra.mrb[0].mxu0 %v768
        %v839 = vpop.f32.mrb[0].mxu0
        %v840 = vadd.f32 %v760, %v839
        %v841 = vpop.f32.mrb[0].mxu0
        %842 = vmatprep.mubr.f32.mxu0 0.0
        %843 = vmatmul.mubr.f32.gmra.mrb[0].mxu0 %v771
        %v844 = vpop.f32.mrb[0].mxu0
        %v845 = vadd.f32 %v765, %v844
        %v846 = vpop.f32.mrb[0].mxu0
        %847 = vdwg.mxu0
        %v848 = vtanh.pop %v840
        %849 = vst [vmem:[%s268] sm:$0xff] %v848
        %v850 = vxor.u32 %v845, 2147483648
        %v851 = vmul.f32 %v850, 1.442695
        %v852 = vpow.pop %v851
        %v853 = vadd.f32 %v852, 1.0
        %v854 = vrcp.pop %v853
        %v855 = vmul.f32 1.0, %v854
        %856 = vst [vmem:[%s268 + $0x8] sm:$0x1] %v855
        %s857 = sand.u32 %s178, 1
        %s858 = sand.u32 %s178, 1
        %s859 = smul.addr %s858, 16
        %s860 = scalar_lea.vmem [#allocation2], %s859
        // Predicated region
        $region49: #{generalized_predictor_forward.1} parent=47 // pred_check
          %p861 = pneg %p188
        $region50: #{generalized_predictor_forward.1} parent=47 // pred_check_branch
          %863 = sbr.rel (%p861) target = $region52
        $region51: #{generalized_predictor_forward.1} parent=47 // pred_region
          %s864 = smul.addr %s18, 8
          %s865 = scalar_lea.vmem %s7, %s864
          // Predicated region
          $region53: #{generalized_predictor_forward.1} parent=51 // pred_check
            _
          $region54: #{generalized_predictor_forward.1} parent=51 // pred_check_branch
            %867 = sbr.rel (0) target = $region56
          $region55: #{generalized_predictor_forward.1} parent=51 // pred_region
            // Predicated region
            $region57: #{generalized_predictor_forward.1} parent=55 // pred_check
              _
            $region58: #{generalized_predictor_forward.1} parent=55 // pred_check_branch
              %869 = sbr.rel (0) target = $region60
            $region59: #{generalized_predictor_forward.1} parent=55 // pred_region
              // Predicated region
              $region72: #{generalized_predictor_forward.1} parent=59 // pred_check
                _
              $region73: #{generalized_predictor_forward.1} parent=59 // pred_check_branch
                %886 = sbr.rel (0) target = $region75
              $region74: #{generalized_predictor_forward.1} parent=59 // pred_region
                loop: start=0, step=1, limit=1
                $region76: #{generalized_predictor_forward.1} parent=74 // loop_pre_header
                  _
                $region77: #{generalized_predictor_forward.1} parent=74 // loop_header
                  %s888 = sphi 0, %s892
                  %p889 = scmp.ge.s32.totalorder %s888, 1
                  %s893 = sphi %s860, %s860
                  %s894 = sphi %s865, %s865
                $region78: #{generalized_predictor_forward.1} parent=74 // loop_header_branch
                  %891 = sbr.rel (%p889) target = $region82
                $region79: #{generalized_predictor_forward.1} parent=74 // loop_body
                  %v895 = vld [vmem:[%s893] sm:$0xff]
                  %896 = vst [vmem:[%s894] sm:$0xff] %v895
                  %v897 = vld [vmem:[%s893 + $0x8] sm:$0xff]
                  %898 = vst [vmem:[%s894 + $0x10] sm:$0xff] %v897
                $region80: #{generalized_predictor_forward.1} parent=74 // loop_footer
                  %s892 = sadd.s32 1, %s888
                $region81: #{generalized_predictor_forward.1} parent=74 // loop_footer_branch
                  %887 = sbr.rel target = $region77
                $region82: #{generalized_predictor_forward.1} parent=74 // loop_exit
                  _
              $region75: #{generalized_predictor_forward.1} parent=59 // pred_fallthru
                _
              // Predicated region
              $region83: #{generalized_predictor_forward.1} parent=59 // pred_check
                _
              $region84: #{generalized_predictor_forward.1} parent=59 // pred_check_branch
                %900 = sbr.rel target = $region86
              $region85: #{generalized_predictor_forward.1} parent=59 // pred_region
                _
              $region86: #{generalized_predictor_forward.1} parent=59 // pred_fallthru
                _
            $region60: #{generalized_predictor_forward.1} parent=55 // pred_fallthru
              _
            // Predicated region
            $region61: #{generalized_predictor_forward.1} parent=55 // pred_check
              _
            $region62: #{generalized_predictor_forward.1} parent=55 // pred_check_branch
              %871 = sbr.rel target = $region64
            $region63: #{generalized_predictor_forward.1} parent=55 // pred_region
              loop: start=0, step=1, limit=1
              $region65: #{generalized_predictor_forward.1} parent=63 // loop_pre_header
                _
              $region66: #{generalized_predictor_forward.1} parent=63 // loop_header
                %s874 = sphi 0, %s878
                %p875 = scmp.ge.s32.totalorder %s874, 1
                %s879 = sphi %s860, %s860
                %s880 = sphi %s865, %s865
              $region67: #{generalized_predictor_forward.1} parent=63 // loop_header_branch
                %877 = sbr.rel (%p875) target = $region71
              $region68: #{generalized_predictor_forward.1} parent=63 // loop_body
                %v881 = vld [vmem:[%s879] sm:$0xff]
                %882 = vst [vmem:[%s880] sm:$0xff] %v881
                %v883 = vld [vmem:[%s879 + $0x8] sm:$0xff]
                %884 = vst [vmem:[%s880 + $0x10] sm:$0xff] %v883
              $region69: #{generalized_predictor_forward.1} parent=63 // loop_footer
                %s878 = sadd.s32 1, %s874
              $region70: #{generalized_predictor_forward.1} parent=63 // loop_footer_branch
                %873 = sbr.rel target = $region66
              $region71: #{generalized_predictor_forward.1} parent=63 // loop_exit
                _
            $region64: #{generalized_predictor_forward.1} parent=55 // pred_fallthru
              _
          $region56: #{generalized_predictor_forward.1} parent=51 // pred_fallthru
            _
          %901 = vnop
        $region52: #{generalized_predictor_forward.1} parent=47 // pred_fallthru
          _
      $region48: #{generalized_predictor_forward.1} parent=5 // pred_fallthru
        _
      %p902 = scmp.le.s32.totalorder 2, %s13
      // Predicated region
      $region87: #{generalized_predictor_forward.1} parent=5 // pred_check
        %p903 = pneg %p902
      $region88: #{generalized_predictor_forward.1} parent=5 // pred_check_branch
        %905 = sbr.rel (%p903) target = $region90
      $region89: #{generalized_predictor_forward.1} parent=5 // pred_region
        %s906 = ssub.s32 %s13, 2
        // Predicated region
        $region91: #{generalized_predictor_forward.1} parent=89 // pred_check
          %p907 = pneg %p194
        $region92: #{generalized_predictor_forward.1} parent=89 // pred_check_branch
          %909 = sbr.rel (%p907) target = $region94
        $region93: #{generalized_predictor_forward.1} parent=89 // pred_region
          %s910 = sand.u32 %s179, 1
          %s911 = sand.u32 %s179, 1
          %s912 = smul.addr %s911, 16
          %s913 = scalar_lea.vmem [#allocation2], %s912
        $region94: #{generalized_predictor_forward.1} parent=89 // pred_fallthru
          _
      $region90: #{generalized_predictor_forward.1} parent=5 // pred_fallthru
        _
    $region6: #{generalized_predictor_forward.1} parent=1 // loop_footer
      %s17 = sadd.s32 1, %s13
    $region7: #{generalized_predictor_forward.1} parent=1 // loop_footer_branch
      %12 = sbr.rel target = $region3
    $region8: #{generalized_predictor_forward.1} parent=1 // loop_exit
      _

</llo_original>
